<compile_context>
chip_gen: v6e
topology: v6e:2x2x1
jax: 0.10.0
libtpu: 0.0.40
codegen_flags: <defaults>
</compile_context>

<pallas_src>
import functools

import jax
import jax.numpy as jnp
from jax.experimental import pallas as pl
from jax.experimental.pallas import tpu as pltpu


def _rmsnorm_kernel(x_ref, scale_ref, o_ref, *, eps: float):
    # x_ref: (row_block, dim) tile in the input dtype; scale_ref: (1, dim) f32.
    x = x_ref[...].astype(jnp.float32)
    ms = jnp.mean(x * x, axis=-1, keepdims=True)       # f32 reduction, lane axis
    inv = jax.lax.rsqrt(ms + eps)                      # EUP rsqrt
    o_ref[...] = (x * inv * scale_ref[...]).astype(o_ref.dtype)


def _vmem_capacity_bytes() -> int:
    """Physical VMEM per core; conservative (v7x) fallback if the query fails."""
    try:
        cap = getattr(pltpu.get_tpu_info(), "vmem_capacity_bytes", None)
        if cap:
            return int(cap)
    except Exception:
        pass
    return 64 << 20


def _sublane_pack(itemsize: int) -> int:
    # Packed sublane-tile height: f32 -> 8, bf16/f16 -> 16, int8/fp8 -> 32.
    return max(8, 32 // max(itemsize, 1))


def _pick_row_block(rows: int, dim: int, itemsize: int, target_bytes: int) -> int:
    """Largest pack-aligned row tile whose double-buffered in/out tiles plus
    ~3 f32 temporaries fit the target VMEM working set.  No artificial row cap."""
    pack = _sublane_pack(itemsize)
    # 2x double-buffered input + 2x output tiles (input dtype) + ~3 f32 temps.
    per_row = dim * (4 * itemsize + 12)
    rb = max(target_bytes // max(per_row, 1), pack)
    rb = (rb // pack) * pack
    rows_padded = ((rows + pack - 1) // pack) * pack   # never tile larger than the array
    return max(pack, min(rb, rows_padded))


def rmsnorm(x, weight, *, eps: float = 1e-6, add_unit_offset: bool = True,
            row_block: int | None = None):
    """RMSNorm over the last axis of x, scaled by (1 + weight) in float32,
    result cast back to x.dtype (matches the PyTorch module exactly)."""
    orig_shape = x.shape
    dim = orig_shape[-1]
    assert weight.shape == (dim,)

    x2d = x.reshape(-1, dim)
    rows = x2d.shape[0]
    itemsize = jnp.dtype(x.dtype).itemsize
    pack = _sublane_pack(itemsize)

    # Generation-aware VMEM budget.
    vmem_cap = _vmem_capacity_bytes()
    big_vmem = vmem_cap >= (96 << 20)                    # v5e / v6e: 128 MiB parts
    target_bytes = (56 << 20) if big_vmem else (22 << 20)  # v7x: stay well under 64 MiB

    if row_block is None:
        row_block = _pick_row_block(rows, dim, itemsize, target_bytes)
    row_block = max(pack, (row_block // pack) * pack)

    # Guarantee >= 2 grid blocks whenever the array splits into two pack-aligned
    # tiles, so the "parallel" grid axis can shard across v7x's two TensorCores.
    if pl.cdiv(rows, row_block) < 2 and rows > pack:
        half = pl.cdiv(pl.cdiv(rows, 2), pack) * pack
        row_block = max(pack, min(row_block, half))

    num_blocks = pl.cdiv(rows, row_block)   # partial last block masked on writeback

    # Hoist the f32 (1 + weight) scale row; constant index_map below keeps it
    # resident in VMEM instead of re-DMA'ing it each step.
    scale = weight.astype(jnp.float32)
    if add_unit_offset:
        scale = scale + 1.0
    scale = scale.reshape(1, dim)

    # VMEM limit: double-buffered in/out tiles + scale + ~3 f32 temps + headroom,
    # clamped per generation (>= 8 MiB headroom under v7x's 64 MiB physical VMEM).
    block_bytes = row_block * dim * itemsize
    pipeline_bytes = 2 * (2 * block_bytes) + 2 * dim * 4
    temp_bytes = 3 * row_block * dim * 4
    want = pipeline_bytes + temp_bytes + (4 << 20)
    ceiling = (100 << 20) if big_vmem else max(vmem_cap - (8 << 20), 32 << 20)
    vmem_limit = int(min(max(want, 32 << 20), ceiling))

    cost = pl.CostEstimate(
        flops=4 * rows * dim,
        transcendentals=rows,
        bytes_accessed=2 * rows * dim * itemsize + dim * 4,
    )

    kernel = functools.partial(_rmsnorm_kernel, eps=eps)

    out2d = pl.pallas_call(
        kernel,
        out_shape=jax.ShapeDtypeStruct((rows, dim), x.dtype),
        grid_spec=pl.GridSpec(
            grid=(num_blocks,),
            in_specs=[
                pl.BlockSpec((row_block, dim), lambda i: (i, 0)),  # x row tile
                pl.BlockSpec((1, dim), lambda i: (0, 0)),          # f32 scale row
            ],
            out_specs=pl.BlockSpec((row_block, dim), lambda i: (i, 0)),
        ),
        compiler_params=pltpu.CompilerParams(
            dimension_semantics=("parallel",),
            vmem_limit_bytes=vmem_limit,
        ),
        cost_estimate=cost,
    )(x2d, scale)

    return out2d.reshape(orig_shape)


def _rmsnorm_ref(x, weight, eps=1e-6, add_unit_offset=True):
    xf = x.astype(jnp.float32)
    normed = xf * jax.lax.rsqrt(jnp.mean(xf * xf, axis=-1, keepdims=True) + eps)
    wf = weight.astype(jnp.float32)
    out = normed * ((1.0 + wf) if add_unit_offset else wf)
    return out.astype(x.dtype)


if __name__ == "__main__":
    # Small shapes consistent with the module: batch=2, seq=8, hidden=32.
    batch, seq, dim = 2, 8, 32
    key = jax.random.PRNGKey(0)
    kx, kw = jax.random.split(key)

    x = jax.random.normal(kx, (batch, seq, dim), dtype=jnp.float32).astype(jnp.bfloat16)
    # Module __init__ creates weight = zeros(dim); perturb deterministically so
    # the (1 + weight) path is exercised.
    weight = jnp.zeros((dim,), jnp.float32) + 0.1 * jax.random.normal(kw, (dim,), jnp.float32)

    out = jax.block_until_ready(rmsnorm(x, weight, eps=1e-6, add_unit_offset=True))
    ref = _rmsnorm_ref(x, weight)
    assert out.shape == x.shape and out.dtype == x.dtype
    assert jnp.allclose(out.astype(jnp.float32), ref.astype(jnp.float32),
                        atol=1e-2, rtol=1e-2)

    # Non-divisible row count (3*37 = 111 rows, bf16): exercises the partial
    # last block, the pack-of-16 rounding, and the >=2-block split.
    x2 = jax.random.normal(kx, (3, 37, 256), dtype=jnp.float32).astype(jnp.bfloat16)
    w2 = 0.05 * jax.random.normal(kw, (256,), jnp.float32)
    out2 = jax.block_until_ready(rmsnorm(x2, w2))
    ref2 = _rmsnorm_ref(x2, w2)
    assert jnp.allclose(out2.astype(jnp.float32), ref2.astype(jnp.float32),
                        atol=1e-2, rtol=1e-2)

    # f32 path (pack of 8) and add_unit_offset=False branch.
    x3 = jax.random.normal(kx, (4, 24, 128), dtype=jnp.float32)
    w3 = 1.0 + 0.05 * jax.random.normal(kw, (128,), jnp.float32)
    out3 = jax.block_until_ready(rmsnorm(x3, w3, add_unit_offset=False))
    ref3 = _rmsnorm_ref(x3, w3, add_unit_offset=False)
    assert jnp.allclose(out3, ref3, atol=1e-5, rtol=1e-5)

    print("KERNEL_OK")
</pallas_src>

<mosaic_0001>
module attributes {stable_mosaic.version = 11 : i64} {
  func.func @_rmsnorm_kernel(%arg0: i32, %arg1: memref<16x32xbf16, #tpu.memory_space<vmem>>, %arg2: memref<1x32xf32, #tpu.memory_space<vmem>>, %arg3: memref<16x32xbf16, #tpu.memory_space<vmem>>) attributes {dimension_semantics = [#tpu.dimension_semantics<parallel>], iteration_bounds = array<i64: 1>, scalar_prefetch = 0 : i64, scratch_operands = 0 : i64, tpu.core_type = #tpu.core_type<tc>, window_params = [{transform_indices = @transform_0, window_bounds = array<i64: 16, 32>}, {pipeline_mode = #tpu.pipeline_mode<synchronous>, transform_indices = @transform_1, window_bounds = array<i64: 1, 32>}, {transform_indices = @transform_2, window_bounds = array<i64: 16, 32>}]} {
    %c0 = arith.constant 0 : index
    %c0_0 = arith.constant 0 : index
    %0 = vector.load %arg1[%c0, %c0_0] : memref<16x32xbf16, #tpu.memory_space<vmem>>, vector<16x32xbf16>
    %1 = arith.extf %0 : vector<16x32xbf16> to vector<16x32xf32>
    %2 = arith.mulf %1, %1 : vector<16x32xf32>
    %cst = arith.constant dense<0.000000e+00> : vector<16xf32>
    %3 = vector.multi_reduction <add>, %2, %cst [1] : vector<16x32xf32> to vector<16xf32>
    %4 = vector.shape_cast %3 : vector<16xf32> to vector<16x1xf32>
    %cst_1 = arith.constant 3.200000e+01 : f32
    %5 = vector.broadcast %cst_1 : f32 to vector<16x1xf32>
    %6 = arith.divf %4, %5 : vector<16x1xf32>
    %cst_2 = arith.constant 9.99999997E-7 : f32
    %7 = vector.broadcast %cst_2 : f32 to vector<16x1xf32>
    %8 = arith.addf %6, %7 : vector<16x1xf32>
    %9 = math.rsqrt %8 : vector<16x1xf32>
    %10 = vector.broadcast %9 : vector<16x1xf32> to vector<16x32xf32>
    %11 = arith.mulf %1, %10 : vector<16x32xf32>
    %c0_3 = arith.constant 0 : index
    %c0_4 = arith.constant 0 : index
    %12 = vector.load %arg2[%c0_3, %c0_4] : memref<1x32xf32, #tpu.memory_space<vmem>>, vector<1x32xf32>
    %13 = vector.broadcast %12 : vector<1x32xf32> to vector<16x32xf32>
    %14 = arith.mulf %11, %13 : vector<16x32xf32>
    %15 = arith.truncf %14 : vector<16x32xf32> to vector<16x32xbf16>
    %c0_5 = arith.constant 0 : index
    %c0_6 = arith.constant 0 : index
    %16 = vector.load %arg3[%c0_5, %c0_6] : memref<16x32xbf16, #tpu.memory_space<vmem>>, vector<16x32xbf16>
    tpu.vector_store %arg3[%c0_5, %c0_6], %15 {strides = array<i32>} : memref<16x32xbf16, #tpu.memory_space<vmem>>, vector<16x32xbf16>,
    return
  }
  func.func @transform_0(%arg0: i32) -> (i32, i32) {
    %c0_i32 = arith.constant 0 : i32
    %c0_i32_0 = arith.constant 0 : i32
    return %arg0, %c0_i32 : i32, i32
  }
  func.func @transform_1(%arg0: i32) -> (i32, i32) {
    %c0_i32 = arith.constant 0 : i32
    %c0_i32_0 = arith.constant 0 : i32
    %c0_i32_1 = arith.constant 0 : i32
    return %c0_i32, %c0_i32_0 : i32, i32
  }
  func.func @transform_2(%arg0: i32) -> (i32, i32) {
    %c0_i32 = arith.constant 0 : i32
    %c0_i32_0 = arith.constant 0 : i32
    return %arg0, %c0_i32 : i32, i32
  }
}

</mosaic_0001>

<llo_original>
// kernel: tpu_custom_call.1
$region0: #{tpu_custom_call.1}
  #allocation0 [shape = 'u32[]', space=smem, size = 0x4, offset = 0x4, fixed_abs, tag = 'smem constant byte address 0x4 - core index']
  #allocation1 [shape = 'u32[144,128]{1,0:T(1,128)}', space=vmem, size = 0x12000, scoped, tag = 'internal scratch']
  %s0 = inlined_call_operand.hbm [shape: bf16[16,32], index: 0, kind: input, shape index: {}]
  %s1 = inlined_call_operand.vmem [shape: f32[1,32], index: 1, kind: input, shape index: {}]
  %s2 = inlined_call_operand.hbm [shape: bf16[16,32], index: 2, kind: output, shape index: {}]
  %s3 = sld [smem:[#allocation0]]
  $region22: #{tpu_custom_call.1} parent=0
    _
  %s5 = ssub.s32 1, %s3
  %s6 = scalar_select 0, %s5, %s3
  $region1: #{tpu_custom_call.1} parent=0
    #allocation2 [shape = 'u8[4096]{0}', space=vmem, size = 0x1000, scoped, tag = 'input window, operand 0, single buffered']
    #allocation3 [shape = 's32[1]{0}', space=sflag, size = 0x4, scoped, tag = 'scoped memory for tpu_custom_call.1']
    #allocation4 [shape = 's32[1]{0}', space=sflag, size = 0x4, scoped, tag = 'scoped memory for tpu_custom_call.1']
    #allocation5 [shape = 'u8[4096]{0}', space=vmem, size = 0x1000, scoped, tag = 'output window, operand 0, single buffered']
    %7 = vsyncpa [#allocation3], 0
    %8 = vsyncpa [#allocation4], 0
    // Predicated region
    $region2: #{tpu_custom_call.1} parent=1 // pred_check
      _
    $region3: #{tpu_custom_call.1} parent=1 // pred_check_branch
      %10 = sbr.rel (0) target = $region5
    $region4: #{tpu_custom_call.1} parent=1 // pred_region
      %s12 = ssub.s32 128, 128
      %13 = vsyncadd [#allocation3], %s12
      %s14 = sshll.u32 [#allocation2], 4
      %s15 = int_to_ptr.vmem [resolvable:$true] %s14
      %20 = dma.hbm_to_vmem [thread:$0]  %s0, 128, %s15, [#allocation3], 64, 64, 4
    $region5: #{tpu_custom_call.1} parent=1 // pred_fallthru
      _
    // Predicated region
    $region6: #{tpu_custom_call.1} parent=1 // pred_check
      _
    $region7: #{tpu_custom_call.1} parent=1 // pred_check_branch
      %22 = sbr.rel (0) target = $region9
    $region8: #{tpu_custom_call.1} parent=1 // pred_region
      _
    $region9: #{tpu_custom_call.1} parent=1 // pred_fallthru
      _
    // Predicated region
    $region10: #{tpu_custom_call.1} parent=1 // pred_check
      _
    $region11: #{tpu_custom_call.1} parent=1 // pred_check_branch
      %24 = sbr.rel (0) target = $region13
    $region12: #{tpu_custom_call.1} parent=1 // pred_region
      %25 = dma.done [#allocation3], 128
    $region13: #{tpu_custom_call.1} parent=1 // pred_fallthru
      _
    %v26 = vld [vmem:[#allocation2] sm:$0xf]
    %v27 = vld [vmem:[#allocation2 + $0x4] sm:$0xf]
    %v28 = vunpack.c.l.bf16 %v26
    %v29 = vunpack.c.l.bf16 %v27
    %v30 = vmul.f32 %v28, %v28
    %v31 = vmul.f32 %v29, %v29
    %vm32 = vcmask 261120
    %v33 = vsel %vm32, %v30, 0.0
    %34 = vadd.xlane.f32.xlu0 %v33
    %v35 = vpop.xlane.xlu0 %34
    %v36 = vsel %vm32, %v31, 0.0
    %37 = vadd.xlane.f32.xlu0 %v36
    %v38 = vpop.xlane.xlu0 %37
    %v39 = vrcp.pop 32.0
    %v40 = vmul.f32 %v35, %v39
    %v41 = vmul.f32 %v38, %v39
    %v42 = vadd.f32 %v40, 1e-06
    %v43 = vadd.f32 %v41, 1e-06
    %v44 = vrsqrt.pop %v42
    %v45 = vrsqrt.pop %v43
    %v46 = vmul.f32 %v28, %v44
    %v47 = vmul.f32 %v29, %v45
    %v48 = vld [vmem:[%s1] sm:$0x1]
    %v50 = vlaneseq
    %v51 = vshrl.u32 %v50, 7
    %v52 = vsub.s32 0, %v51
    %v53 = vrot.slane %v48, %v52
    %v55 = vmul.f32 %v46, %v53
    %v56 = vmul.f32 %v47, %v53
    %v57 = vpack.c.bf16 %v56, %v55
    %v59 = vunpack.c.l.b16 %v57
    %v60 = vunpack.c.h.b16 %v57
    %v61 = vpack.c.b16 %v59, %v59
    %v62 = vpack.c.b16 %v60, %v60
    %vm65 = vcmask 257024
    %66 = vst.msk [vmem:[#allocation5] sm:$0xf] %vm65, %v61
    %67 = vst.msk [vmem:[#allocation5 + $0x4] sm:$0xf] %vm65, %v62
    // Predicated region
    $region14: #{tpu_custom_call.1} parent=1 // pred_check
      _
    $region15: #{tpu_custom_call.1} parent=1 // pred_check_branch
      %69 = sbr.rel (0) target = $region17
    $region16: #{tpu_custom_call.1} parent=1 // pred_region
      %s71 = ssub.s32 128, 128
      %72 = vsyncadd [#allocation4], %s71
      %s73 = sshll.u32 [#allocation5], 4
      %s74 = int_to_ptr.vmem [resolvable:$true] %s73
      %79 = dma.vmem_to_hbm [thread:$0]  %s74, 128, %s2, [#allocation4], 64, 64, 4
    $region17: #{tpu_custom_call.1} parent=1 // pred_fallthru
      _
    // Predicated region
    $region18: #{tpu_custom_call.1} parent=1 // pred_check
      _
    $region19: #{tpu_custom_call.1} parent=1 // pred_check_branch
      %81 = sbr.rel (0) target = $region21
    $region20: #{tpu_custom_call.1} parent=1 // pred_region
      %82 = dma.done [#allocation4], 128
    $region21: #{tpu_custom_call.1} parent=1 // pred_fallthru
      _
    %83 = vsyncpa [#allocation3], 1
    %84 = vsyncpa [#allocation4], 1

</llo_original>
